<compile_context>
chip_gen: v7x
topology: tpu7x:2x2x1
jax: 0.10.0
libtpu: 0.0.40
codegen_flags: <defaults>
</compile_context>

<pallas_src>
import jax
import jax.numpy as jnp
from jax.experimental import pallas as pl
from jax.experimental.pallas import tpu as pltpu


# ----------------------------- helpers -------------------------------------

def _round_up(x, m):
    return ((x + m - 1) // m) * m


def _pad2(a, rows, cols):
    return jnp.pad(a, ((0, rows - a.shape[0]), (0, cols - a.shape[1])))


def _fold_bn(gamma, beta, mean, var, eps=1e-5):
    scale = gamma / jnp.sqrt(var + eps)
    bias = beta - mean * scale
    return scale.astype(jnp.float32), bias.astype(jnp.float32)


def _pick_batch_tile(n):
    """Pack several samples per grid step, keep >= 2 steps when possible."""
    if n <= 1:
        return 1
    for bt in range(max(1, n // 2), 0, -1):
        if n % bt == 0:
            return bt
    return 1


# ----------------------------- wrapper --------------------------------------

def bottleneck_block_1d(x_ncl, params, stride):
    """x_ncl: (N, Cin, L) float32 (PyTorch NCL). Returns (N, Cout, L2)."""
    N, Cin, L = x_ncl.shape
    H = params["w1"].shape[0]
    Cout = params["w3"].shape[0]
    L2 = (L - 1) // stride + 1
    Hp = _round_up(H, 128)        # lane-dense hidden channels
    Cop = _round_up(Cout, 128)    # lane-dense output channels
    B = _pick_batch_tile(N)
    assert N % B == 0

    # halo buffer: y1 slab lives at sublane offset 8 (aligned store), the two
    # zero halo rows sit at 7 (left pad) and L+8 (right pad).
    HALO = 8
    Lbuf = _round_up(L + HALO + 1, 8)

    x = jnp.transpose(x_ncl, (0, 2, 1)).astype(jnp.float32)             # (N, L, Cin)

    # ---- fold BatchNorm scales into the conv weights (inference mode) ----
    s1, b1v = _fold_bn(*params["bn1"])
    s2, b2v = _fold_bn(*params["bn2"])
    s3, b3v = _fold_bn(*params["bn3"])

    w1 = _pad2(params["w1"][:, :, 0].T * s1[None, :], Cin, Hp)          # (Cin, Hp)
    b1 = _pad2(b1v[None, :], 1, Hp)                                      # (1, Hp)

    # conv2 weight: (H, H, 3) -> [k][cin][cout], BN scale folded, taps stacked
    w2_k = jnp.transpose(params["w2"], (2, 1, 0)) * s2[None, None, :]
    w2 = jnp.concatenate([_pad2(w2_k[k], Hp, Hp) for k in range(3)], axis=0)  # (3*Hp, Hp)
    b2 = _pad2(b2v[None, :], 1, Hp)

    w3 = _pad2(params["w3"][:, :, 0].T * s3[None, :], Hp, Cop)          # (Hp, Cop)
    b3 = _pad2(b3v[None, :], 1, Cop)

    if "wd" in params:
        sd, bdv = _fold_bn(*params["bnd"])
        wd = params["wd"][:, :, 0].T * sd[None, :]                      # (Cin, Cout)
        bd = bdv[None, :]
    else:   # identity residual path (stride == 1 and Cin == Cout in the module)
        wd = jnp.eye(Cin, Cout, dtype=jnp.float32)
        bd = jnp.zeros((1, Cout), jnp.float32)
    wd = _pad2(wd, Cin, Cop)
    bd = _pad2(bd, 1, Cop)

    # -------------------------- Pallas kernel --------------------------
    def kernel(x_ref, w1_ref, b1_ref, w2_ref, b2_ref, w3_ref, b3_ref,
               wd_ref, bd_ref, o_ref, y1s_ref):
        # zero halo rows of the conv2 staging buffer (per-sample zero padding)
        zrow = jnp.zeros((B, 1, Hp), jnp.float32)
        y1s_ref[:, pl.ds(HALO - 1, 1), :] = zrow
        y1s_ref[:, pl.ds(HALO + L, 1), :] = zrow

        x_blk = x_ref[...]                                               # (B, L, Cin)

        # conv1: 1x1 conv (+ folded BN) + ReLU
        y1 = jnp.dot(x_blk.reshape(B * L, Cin), w1_ref[...],
                     preferred_element_type=jnp.float32) + b1_ref[...]
        y1 = jnp.maximum(y1, 0.0)                                        # (B*L, Hp)
        # sublane-aligned slab store (start=8, unmasked vst for the bulk)
        y1s_ref[:, pl.ds(HALO, L), :] = y1.reshape(B, L, Hp)

        # conv2: k=3, pad=1, stride -- strided halo reads, single fused matmul
        def strided_rows(ref, start):
            if stride == 1:
                return ref[:, pl.ds(start, L2), :]
            return ref[:, pl.ds(start, L2, stride=stride), :]

        y_prev = strided_rows(y1s_ref, HALO - 1)                         # (B, L2, Hp)
        y_cent = strided_rows(y1s_ref, HALO)
        y_next = strided_rows(y1s_ref, HALO + 1)
        y_cat = jnp.concatenate([y_prev, y_cent, y_next], axis=-1)       # (B, L2, 3*Hp)
        y2 = jnp.dot(y_cat.reshape(B * L2, 3 * Hp), w2_ref[...],
                     preferred_element_type=jnp.float32) + b2_ref[...]
        y2 = jnp.maximum(y2, 0.0)                                        # (B*L2, Hp)

        # conv3: 1x1 conv (+ folded BN)
        y3 = jnp.dot(y2, w3_ref[...],
                     preferred_element_type=jnp.float32) + b3_ref[...]   # (B*L2, Cop)

        # downsample residual: strided rows of x -> 1x1 conv (+ folded BN)
        xs = x_blk if stride == 1 else strided_rows(x_ref, 0)            # (B, L2, Cin)
        res = jnp.dot(xs.reshape(B * L2, Cin), wd_ref[...],
                      preferred_element_type=jnp.float32) + bd_ref[...]

        out = jnp.maximum(y3 + res, 0.0)
        o_ref[...] = out.reshape(B, L2, Cop)

    rep = lambda n: (0, 0)
    in_specs = [
        pl.BlockSpec((B, L, Cin), lambda n: (n, 0, 0)),
        pl.BlockSpec((Cin, Hp), rep), pl.BlockSpec((1, Hp), rep),
        pl.BlockSpec((3 * Hp, Hp), rep), pl.BlockSpec((1, Hp), rep),
        pl.BlockSpec((Hp, Cop), rep), pl.BlockSpec((1, Cop), rep),
        pl.BlockSpec((Cin, Cop), rep), pl.BlockSpec((1, Cop), rep),
    ]
    out_p = pl.pallas_call(
        kernel,
        out_shape=jax.ShapeDtypeStruct((N, L2, Cop), jnp.float32),
        grid_spec=pltpu.PrefetchScalarGridSpec(
            num_scalar_prefetch=0,
            grid=(N // B,),
            in_specs=in_specs,
            out_specs=pl.BlockSpec((B, L2, Cop), lambda n: (n, 0, 0)),
            scratch_shapes=[pltpu.VMEM((B, Lbuf, Hp), jnp.float32)],
        ),
        compiler_params=pltpu.CompilerParams(
            dimension_semantics=("parallel",)),
    )(x, w1, b1, w2, b2, w3, b3, wd, bd)

    return jnp.transpose(out_p[:, :, :Cout], (0, 2, 1))                 # (N, Cout, L2)


# ----------------------------- pure-JAX reference ---------------------------

def _reference(x, params, stride, eps=1e-5):
    def conv1d(x, w, stride, pad):
        return jax.lax.conv_general_dilated(
            x, w, (stride,), [(pad, pad)], dimension_numbers=("NCH", "OIH", "NCH"))

    def bn(x, p):
        gamma, beta, mean, var = p
        return ((x - mean[None, :, None]) / jnp.sqrt(var[None, :, None] + eps)
                * gamma[None, :, None] + beta[None, :, None])

    out = jnp.maximum(bn(conv1d(x, params["w1"], 1, 0), params["bn1"]), 0.0)
    out = jnp.maximum(bn(conv1d(out, params["w2"], stride, 1), params["bn2"]), 0.0)
    out = bn(conv1d(out, params["w3"], 1, 0), params["bn3"])
    if "wd" in params:
        res = bn(conv1d(x, params["wd"], stride, 0), params["bnd"])
    else:
        res = x
    return jnp.maximum(out + res, 0.0)


# ----------------------------- demo ------------------------------------------

if __name__ == "__main__":
    # Config: in_channels=4, hidden_channels=8, expansion=1 -> out_channels=8,
    # stride=2, act='relu', downsample_type='norm' (downsample branch active).
    N, Cin, L = 2, 4, 16
    H, expansion, stride = 8, 1, 2
    Cout = int(H * expansion)

    key = jax.random.PRNGKey(0)
    ks = jax.random.split(key, 20)

    def bn_params(k, c):
        k1, k2, k3, k4 = jax.random.split(k, 4)
        gamma = 1.0 + 0.1 * jax.random.normal(k1, (c,), jnp.float32)
        beta = 0.1 * jax.random.normal(k2, (c,), jnp.float32)
        mean = 0.1 * jax.random.normal(k3, (c,), jnp.float32)
        var = 0.5 + jnp.abs(jax.random.normal(k4, (c,), jnp.float32))
        return (gamma, beta, mean, var)

    params = {
        "w1": 0.2 * jax.random.normal(ks[0], (H, Cin, 1), jnp.float32),
        "bn1": bn_params(ks[1], H),
        "w2": 0.2 * jax.random.normal(ks[2], (H, H, 3), jnp.float32),
        "bn2": bn_params(ks[3], H),
        "w3": 0.2 * jax.random.normal(ks[4], (Cout, H, 1), jnp.float32),
        "bn3": bn_params(ks[5], Cout),
        "wd": 0.2 * jax.random.normal(ks[6], (Cout, Cin, 1), jnp.float32),
        "bnd": bn_params(ks[7], Cout),
    }

    x = jax.random.normal(ks[8], (N, Cin, L), jnp.float32)

    out = bottleneck_block_1d(x, params, stride)
    out = jax.block_until_ready(out)

    ref = jax.block_until_ready(_reference(x, params, stride))
    assert out.shape == ref.shape, (out.shape, ref.shape)
    assert jnp.allclose(out, ref, atol=1e-4, rtol=1e-4), float(jnp.max(jnp.abs(out - ref)))

    print("KERNEL_OK")
</pallas_src>

<mosaic_0001>
module attributes {stable_mosaic.version = 11 : i64} {
  func.func @kernel(%arg0: i32, %arg1: memref<1x16x4xf32, #tpu.memory_space<vmem>>, %arg2: memref<4x128xf32, #tpu.memory_space<vmem>>, %arg3: memref<1x128xf32, #tpu.memory_space<vmem>>, %arg4: memref<384x128xf32, #tpu.memory_space<vmem>>, %arg5: memref<1x128xf32, #tpu.memory_space<vmem>>, %arg6: memref<128x128xf32, #tpu.memory_space<vmem>>, %arg7: memref<1x128xf32, #tpu.memory_space<vmem>>, %arg8: memref<4x128xf32, #tpu.memory_space<vmem>>, %arg9: memref<1x128xf32, #tpu.memory_space<vmem>>, %arg10: memref<1x8x128xf32, #tpu.memory_space<vmem>>, %arg11: memref<1x32x128xf32, #tpu.memory_space<vmem>>) attributes {dimension_semantics = [#tpu.dimension_semantics<parallel>], iteration_bounds = array<i64: 2>, scalar_prefetch = 0 : i64, scratch_operands = 1 : i64, tpu.core_type = #tpu.core_type<tc>, window_params = [{transform_indices = @transform_0, window_bounds = array<i64: 1, 16, 4>}, {pipeline_mode = #tpu.pipeline_mode<synchronous>, transform_indices = @transform_1, window_bounds = array<i64: 4, 128>}, {pipeline_mode = #tpu.pipeline_mode<synchronous>, transform_indices = @transform_2, window_bounds = array<i64: 1, 128>}, {pipeline_mode = #tpu.pipeline_mode<synchronous>, transform_indices = @transform_3, window_bounds = array<i64: 384, 128>}, {pipeline_mode = #tpu.pipeline_mode<synchronous>, transform_indices = @transform_4, window_bounds = array<i64: 1, 128>}, {pipeline_mode = #tpu.pipeline_mode<synchronous>, transform_indices = @transform_5, window_bounds = array<i64: 128, 128>}, {pipeline_mode = #tpu.pipeline_mode<synchronous>, transform_indices = @transform_6, window_bounds = array<i64: 1, 128>}, {pipeline_mode = #tpu.pipeline_mode<synchronous>, transform_indices = @transform_7, window_bounds = array<i64: 4, 128>}, {pipeline_mode = #tpu.pipeline_mode<synchronous>, transform_indices = @transform_8, window_bounds = array<i64: 1, 128>}, {transform_indices = @transform_9, window_bounds = array<i64: 1, 8, 128>}]} {
    %cst = arith.constant 0.000000e+00 : f32
    %0 = vector.broadcast %cst : f32 to vector<1x1x128xf32>
    %c0 = arith.constant 0 : index
    %c7 = arith.constant 7 : index
    %c0_0 = arith.constant 0 : index
    %1 = vector.load %arg11[%c0, %c7, %c0_0] : memref<1x32x128xf32, #tpu.memory_space<vmem>>, vector<1x1x128xf32>
    tpu.vector_store %arg11[%c0, %c7, %c0_0], %0 {strides = array<i32>} : memref<1x32x128xf32, #tpu.memory_space<vmem>>, vector<1x1x128xf32>,
    %c0_1 = arith.constant 0 : index
    %c24 = arith.constant 24 : index
    %c0_2 = arith.constant 0 : index
    %2 = vector.load %arg11[%c0_1, %c24, %c0_2] : memref<1x32x128xf32, #tpu.memory_space<vmem>>, vector<1x1x128xf32>
    tpu.vector_store %arg11[%c0_1, %c24, %c0_2], %0 {strides = array<i32>} : memref<1x32x128xf32, #tpu.memory_space<vmem>>, vector<1x1x128xf32>,
    %c0_3 = arith.constant 0 : index
    %c0_4 = arith.constant 0 : index
    %c0_5 = arith.constant 0 : index
    %3 = vector.load %arg1[%c0_3, %c0_4, %c0_5] : memref<1x16x4xf32, #tpu.memory_space<vmem>>, vector<1x16x4xf32>
    %4 = vector.shape_cast %3 : vector<1x16x4xf32> to vector<16x4xf32>
    %c0_6 = arith.constant 0 : index
    %c0_7 = arith.constant 0 : index
    %5 = vector.load %arg2[%c0_6, %c0_7] : memref<4x128xf32, #tpu.memory_space<vmem>>, vector<4x128xf32>
    %cst_8 = arith.constant dense<0.000000e+00> : vector<16x128xf32>
    %6 = tpu.matmul %4, %5, %cst_8 {dimension_numbers = #tpu.dot_dimension_numbers<[1], [0], [0], [1], [0, 0, 1, 1], [], []>} : vector<16x4xf32>, vector<4x128xf32>, vector<16x128xf32> -> vector<16x128xf32>
    %c0_9 = arith.constant 0 : index
    %c0_10 = arith.constant 0 : index
    %7 = vector.load %arg3[%c0_9, %c0_10] : memref<1x128xf32, #tpu.memory_space<vmem>>, vector<1x128xf32>
    %8 = vector.broadcast %7 : vector<1x128xf32> to vector<16x128xf32>
    %9 = arith.addf %6, %8 : vector<16x128xf32>
    %cst_11 = arith.constant 0.000000e+00 : f32
    %10 = vector.broadcast %cst_11 : f32 to vector<16x128xf32>
    %11 = arith.maximumf %9, %10 : vector<16x128xf32>
    %12 = vector.shape_cast %11 : vector<16x128xf32> to vector<1x16x128xf32>
    %c0_12 = arith.constant 0 : index
    %c8 = arith.constant 8 : index
    %c0_13 = arith.constant 0 : index
    %13 = vector.load %arg11[%c0_12, %c8, %c0_13] : memref<1x32x128xf32, #tpu.memory_space<vmem>>, vector<1x16x128xf32>
    tpu.vector_store %arg11[%c0_12, %c8, %c0_13], %12 {strides = array<i32>} : memref<1x32x128xf32, #tpu.memory_space<vmem>>, vector<1x16x128xf32>,
    %c0_14 = arith.constant 0 : index
    %c7_15 = arith.constant 7 : index
    %c0_16 = arith.constant 0 : index
    %14 = tpu.strided_load %arg11[%c0_14, %c7_15, %c0_16] {strides = array<i32: 1, 2, 1>} : memref<1x32x128xf32, #tpu.memory_space<vmem>>, vector<1x8x128xf32>
    %c0_17 = arith.constant 0 : index
    %c8_18 = arith.constant 8 : index
    %c0_19 = arith.constant 0 : index
    %15 = tpu.strided_load %arg11[%c0_17, %c8_18, %c0_19] {strides = array<i32: 1, 2, 1>} : memref<1x32x128xf32, #tpu.memory_space<vmem>>, vector<1x8x128xf32>
    %c0_20 = arith.constant 0 : index
    %c9 = arith.constant 9 : index
    %c0_21 = arith.constant 0 : index
    %16 = tpu.strided_load %arg11[%c0_20, %c9, %c0_21] {strides = array<i32: 1, 2, 1>} : memref<1x32x128xf32, #tpu.memory_space<vmem>>, vector<1x8x128xf32>
    %17 = tpu.concatenate %14, %15, %16 in 2 : vector<1x8x128xf32>, vector<1x8x128xf32>, vector<1x8x128xf32> -> vector<1x8x384xf32>
    %18 = vector.shape_cast %17 : vector<1x8x384xf32> to vector<8x384xf32>
    %c0_22 = arith.constant 0 : index
    %c0_23 = arith.constant 0 : index
    %19 = vector.load %arg4[%c0_22, %c0_23] : memref<384x128xf32, #tpu.memory_space<vmem>>, vector<384x128xf32>
    %cst_24 = arith.constant dense<0.000000e+00> : vector<8x128xf32>
    %20 = tpu.matmul %18, %19, %cst_24 {dimension_numbers = #tpu.dot_dimension_numbers<[1], [0], [0], [1], [0, 0, 1, 1], [], []>} : vector<8x384xf32>, vector<384x128xf32>, vector<8x128xf32> -> vector<8x128xf32>
    %c0_25 = arith.constant 0 : index
    %c0_26 = arith.constant 0 : index
    %21 = vector.load %arg5[%c0_25, %c0_26] : memref<1x128xf32, #tpu.memory_space<vmem>>, vector<1x128xf32>
    %22 = vector.broadcast %21 : vector<1x128xf32> to vector<8x128xf32>
    %23 = arith.addf %20, %22 : vector<8x128xf32>
    %cst_27 = arith.constant 0.000000e+00 : f32
    %24 = vector.broadcast %cst_27 : f32 to vector<8x128xf32>
    %25 = arith.maximumf %23, %24 : vector<8x128xf32>
    %c0_28 = arith.constant 0 : index
    %c0_29 = arith.constant 0 : index
    %26 = vector.load %arg6[%c0_28, %c0_29] : memref<128x128xf32, #tpu.memory_space<vmem>>, vector<128x128xf32>
    %cst_30 = arith.constant dense<0.000000e+00> : vector<8x128xf32>
    %27 = tpu.matmul %25, %26, %cst_30 {dimension_numbers = #tpu.dot_dimension_numbers<[1], [0], [0], [1], [0, 0, 1, 1], [], []>} : vector<8x128xf32>, vector<128x128xf32>, vector<8x128xf32> -> vector<8x128xf32>
    %c0_31 = arith.constant 0 : index
    %c0_32 = arith.constant 0 : index
    %28 = vector.load %arg7[%c0_31, %c0_32] : memref<1x128xf32, #tpu.memory_space<vmem>>, vector<1x128xf32>
    %29 = vector.broadcast %28 : vector<1x128xf32> to vector<8x128xf32>
    %30 = arith.addf %27, %29 : vector<8x128xf32>
    %c0_33 = arith.constant 0 : index
    %c0_34 = arith.constant 0 : index
    %c0_35 = arith.constant 0 : index
    %31 = tpu.strided_load %arg1[%c0_33, %c0_34, %c0_35] {strides = array<i32: 1, 2, 1>} : memref<1x16x4xf32, #tpu.memory_space<vmem>>, vector<1x8x4xf32>
    %32 = vector.shape_cast %31 : vector<1x8x4xf32> to vector<8x4xf32>
    %c0_36 = arith.constant 0 : index
    %c0_37 = arith.constant 0 : index
    %33 = vector.load %arg8[%c0_36, %c0_37] : memref<4x128xf32, #tpu.memory_space<vmem>>, vector<4x128xf32>
    %cst_38 = arith.constant dense<0.000000e+00> : vector<8x128xf32>
    %34 = tpu.matmul %32, %33, %cst_38 {dimension_numbers = #tpu.dot_dimension_numbers<[1], [0], [0], [1], [0, 0, 1, 1], [], []>} : vector<8x4xf32>, vector<4x128xf32>, vector<8x128xf32> -> vector<8x128xf32>
    %c0_39 = arith.constant 0 : index
    %c0_40 = arith.constant 0 : index
    %35 = vector.load %arg9[%c0_39, %c0_40] : memref<1x128xf32, #tpu.memory_space<vmem>>, vector<1x128xf32>
    %36 = vector.broadcast %35 : vector<1x128xf32> to vector<8x128xf32>
    %37 = arith.addf %34, %36 : vector<8x128xf32>
    %38 = arith.addf %30, %37 : vector<8x128xf32>
    %cst_41 = arith.constant 0.000000e+00 : f32
    %39 = vector.broadcast %cst_41 : f32 to vector<8x128xf32>
    %40 = arith.maximumf %38, %39 : vector<8x128xf32>
    %41 = vector.shape_cast %40 : vector<8x128xf32> to vector<1x8x128xf32>
    %c0_42 = arith.constant 0 : index
    %c0_43 = arith.constant 0 : index
    %c0_44 = arith.constant 0 : index
    %42 = vector.load %arg10[%c0_42, %c0_43, %c0_44] : memref<1x8x128xf32, #tpu.memory_space<vmem>>, vector<1x8x128xf32>
    tpu.vector_store %arg10[%c0_42, %c0_43, %c0_44], %41 {strides = array<i32>} : memref<1x8x128xf32, #tpu.memory_space<vmem>>, vector<1x8x128xf32>,
    return
  }
  func.func @transform_0(%arg0: i32) -> (i32, i32, i32) {
    %c0_i32 = arith.constant 0 : i32
    %c0_i32_0 = arith.constant 0 : i32
    %c0_i32_1 = arith.constant 0 : i32
    return %arg0, %c0_i32, %c0_i32_0 : i32, i32, i32
  }
  func.func @transform_1(%arg0: i32) -> (i32, i32) {
    %c0_i32 = arith.constant 0 : i32
    %c0_i32_0 = arith.constant 0 : i32
    %c0_i32_1 = arith.constant 0 : i32
    return %c0_i32, %c0_i32_0 : i32, i32
  }
  func.func @transform_2(%arg0: i32) -> (i32, i32) {
    %c0_i32 = arith.constant 0 : i32
    %c0_i32_0 = arith.constant 0 : i32
    %c0_i32_1 = arith.constant 0 : i32
    return %c0_i32, %c0_i32_0 : i32, i32
  }
  func.func @transform_3(%arg0: i32) -> (i32, i32) {
    %c0_i32 = arith.constant 0 : i32
    %c0_i32_0 = arith.constant 0 : i32
    %c0_i32_1 = arith.constant 0 : i32
    return %c0_i32, %c0_i32_0 : i32, i32
  }
  func.func @transform_4(%arg0: i32) -> (i32, i32) {
    %c0_i32 = arith.constant 0 : i32
    %c0_i32_0 = arith.constant 0 : i32
    %c0_i32_1 = arith.constant 0 : i32
    return %c0_i32, %c0_i32_0 : i32, i32
  }
  func.func @transform_5(%arg0: i32) -> (i32, i32) {
    %c0_i32 = arith.constant 0 : i32
    %c0_i32_0 = arith.constant 0 : i32
    %c0_i32_1 = arith.constant 0 : i32
    return %c0_i32, %c0_i32_0 : i32, i32
  }
  func.func @transform_6(%arg0: i32) -> (i32, i32) {
    %c0_i32 = arith.constant 0 : i32
    %c0_i32_0 = arith.constant 0 : i32
    %c0_i32_1 = arith.constant 0 : i32
    return %c0_i32, %c0_i32_0 : i32, i32
  }
  func.func @transform_7(%arg0: i32) -> (i32, i32) {
    %c0_i32 = arith.constant 0 : i32
    %c0_i32_0 = arith.constant 0 : i32
    %c0_i32_1 = arith.constant 0 : i32
    return %c0_i32, %c0_i32_0 : i32, i32
  }
  func.func @transform_8(%arg0: i32) -> (i32, i32) {
    %c0_i32 = arith.constant 0 : i32
    %c0_i32_0 = arith.constant 0 : i32
    %c0_i32_1 = arith.constant 0 : i32
    return %c0_i32, %c0_i32_0 : i32, i32
  }
  func.func @transform_9(%arg0: i32) -> (i32, i32, i32) {
    %c0_i32 = arith.constant 0 : i32
    %c0_i32_0 = arith.constant 0 : i32
    %c0_i32_1 = arith.constant 0 : i32
    return %arg0, %c0_i32, %c0_i32_0 : i32, i32, i32
  }
}

</mosaic_0001>

<llo_original>
// kernel: tpu_custom_call.1
$region0: #{tpu_custom_call.1}
  #allocation0 [shape = 'u32[]', space=smem, size = 0x4, offset = 0x4, fixed_abs, tag = 'smem constant byte address 0x4 - core index']
  #allocation1 [shape = 'u32[144,128]{1,0:T(1,128)}', space=vmem, size = 0x12000, scoped, tag = 'internal scratch']
  #allocation2 [shape = 'f32[1,32,128]{2,1,0:T(8,128)}', space=vmem, size = 0x4000, scoped, tag = 'scratch operand']
  %s0 = inlined_call_operand.vmem [shape: f32[2,16,4], index: 0, kind: input, shape index: {}]
  %s1 = inlined_call_operand.vmem [shape: f32[4,128], index: 1, kind: input, shape index: {}]
  %s2 = inlined_call_operand.vmem [shape: f32[1,128], index: 2, kind: input, shape index: {}]
  %s3 = inlined_call_operand.hbm [shape: f32[384,128], index: 3, kind: input, shape index: {}]
  %s4 = inlined_call_operand.vmem [shape: f32[1,128], index: 4, kind: input, shape index: {}]
  %s5 = inlined_call_operand.hbm [shape: f32[128,128], index: 5, kind: input, shape index: {}]
  %s6 = inlined_call_operand.vmem [shape: f32[1,128], index: 6, kind: input, shape index: {}]
  %s7 = inlined_call_operand.vmem [shape: f32[4,128], index: 7, kind: input, shape index: {}]
  %s8 = inlined_call_operand.vmem [shape: f32[1,128], index: 8, kind: input, shape index: {}]
  %s9 = inlined_call_operand.hbm [shape: f32[2,8,128], index: 9, kind: output, shape index: {}]
  %s10 = sld [smem:[#allocation0]]
  $region77: #{tpu_custom_call.1} parent=0
    _
  %s12 = ssub.s32 1, %s10
  %s13 = scalar_select 0, %s12, %s10
  $region1: #{tpu_custom_call.1} parent=0
    #allocation3 [shape = 'u8[196608]{0}', space=vmem, size = 0x30000, scoped, tag = 'input window, operand 3, single buffered']
    #allocation4 [shape = 's32[2]{0}', space=sflag, size = 0x8, scoped, tag = 'scoped memory for tpu_custom_call.1']
    #allocation5 [shape = 's32[2]{0}', space=sflag, size = 0x8, scoped, tag = 'scoped memory for tpu_custom_call.1']
    #allocation6 [shape = 'u8[65536]{0}', space=vmem, size = 0x10000, scoped, tag = 'input window, operand 5, single buffered']
    #allocation7 [shape = 's32[1]{0}', space=sflag, size = 0x4, scoped, tag = 'scoped memory for tpu_custom_call.1']
    #allocation8 [shape = 'u8[8192]{0}', space=vmem, size = 0x2000, scoped, tag = 'output window, operand 0']
    %14 = vsyncpa [#allocation4], 0
    %15 = vsyncpa [#allocation7], 0
    %16 = vsyncpa [#allocation5], 0
    %s17 = scalar_lea.sflag [#allocation5], 1
    %18 = vsyncpa %s17, 0
    loop: start=0, step=1, limit=4
    $region2: #{tpu_custom_call.1} parent=1 // loop_pre_header
      _
    $region3: #{tpu_custom_call.1} parent=1 // loop_header
      %s20 = sphi 0, %s24
      %p21 = scmp.ge.s32.totalorder %s20, 4
      %s30 = sphi 0, %s32
      %s33 = sphi 0, %s30
      %s34 = sphi 0, %s33
      %s50 = sphi 0, %s34
      %s54 = sphi 0, %s54
      %s56 = sphi 0, %s54
      %s57 = sphi 0, %s56
      %s71 = sphi 0, %s57
      %s75 = sphi 0, %s75
      %s77 = sphi 0, %s75
      %s78 = sphi 0, %s77
      %s92 = sphi 0, %s78
      %s96 = sphi 0, %s96
      %s98 = sphi 0, %s96
      %s99 = sphi 0, %s98
      %s113 = sphi 0, %s99
      %s117 = sphi 0, %s117
      %s119 = sphi 0, %s117
      %s120 = sphi 0, %s119
      %s134 = sphi 0, %s120
      %s138 = sphi 0, %s138
      %s140 = sphi 0, %s138
      %s141 = sphi 0, %s140
      %s155 = sphi 0, %s141
      %s159 = sphi 0, %s159
      %s161 = sphi 0, %s159
      %s162 = sphi 0, %s161
      %s176 = sphi 0, %s162
      %s180 = sphi 0, %s180
      %s182 = sphi 0, %s180
      %s183 = sphi 0, %s182
      %s197 = sphi 0, %s183
      %s201 = sphi 0, %s201
      %s203 = sphi 0, %s201
      %s204 = sphi 0, %s203
      %s218 = sphi 0, %s204
      %s224 = sphi 0, %s226
      %s227 = sphi 0, %s224
      %s228 = sphi 0, %s227
      %s244 = sphi 0, %s228
    $region4: #{tpu_custom_call.1} parent=1 // loop_header_branch
      %23 = sbr.rel (%p21) target = $region8
    $region5: #{tpu_custom_call.1} parent=1 // loop_body
      %s25 = ssub.s32 %s20, 1
      %s26 = ssub.s32 %s20, 2
      %s27 = sadd.s32 %s20, 1
      %s28 = ssub.s32 %s20, %s27
      %p29 = scmp.eq.s32.totalorder %s28, 0
      %s31 = sadd.s32 %s30, 1
      %s32 = scalar_select %p29, %s30, %s31
      %p35 = pneg %p29
      %p36 = scmp.eq.s32.totalorder %s20, 1
      %p37 = por %p35, %p36
      %p38 = scmp.ne.s32.totalorder %s30, %s33
      %p39 = scmp.eq.s32.totalorder %s20, 0
      %p40 = por %p38, %p39
      %p41 = scmp.ne.s32.totalorder %s30, %s33
      %p42 = scmp.eq.s32.totalorder %s25, 1
      %p43 = por %p41, %p42
      %p44 = scmp.ne.s32.totalorder %s33, %s34
      %p45 = scmp.eq.s32.totalorder %s25, 0
      %p46 = por %p44, %p45
      %p47 = scmp.ne.s32.totalorder %s33, %s34
      %p48 = scmp.eq.s32.totalorder %s26, 1
      %p49 = por %p47, %p48
      %p51 = scmp.ne.s32.totalorder %s34, %s50
      %p52 = scmp.eq.s32.totalorder %s26, 0
      %p53 = por %p51, %p52
      %s55 = sadd.s32 %s54, 1
      %p58 = scmp.eq.s32.totalorder %s20, 1
      %p59 = scmp.ne.s32.totalorder %s54, %s56
      %p60 = scmp.eq.s32.totalorder %s20, 0
      %p61 = por %p59, %p60
      %p62 = scmp.ne.s32.totalorder %s54, %s56
      %p63 = scmp.eq.s32.totalorder %s25, 1
      %p64 = por %p62, %p63
      %p65 = scmp.ne.s32.totalorder %s56, %s57
      %p66 = scmp.eq.s32.totalorder %s25, 0
      %p67 = por %p65, %p66
      %p68 = scmp.ne.s32.totalorder %s56, %s57
      %p69 = scmp.eq.s32.totalorder %s26, 1
      %p70 = por %p68, %p69
      %p72 = scmp.ne.s32.totalorder %s57, %s71
      %p73 = scmp.eq.s32.totalorder %s26, 0
      %p74 = por %p72, %p73
      %s76 = sadd.s32 %s75, 1
      %p79 = scmp.eq.s32.totalorder %s20, 1
      %p80 = scmp.ne.s32.totalorder %s75, %s77
      %p81 = scmp.eq.s32.totalorder %s20, 0
      %p82 = por %p80, %p81
      %p83 = scmp.ne.s32.totalorder %s75, %s77
      %p84 = scmp.eq.s32.totalorder %s25, 1
      %p85 = por %p83, %p84
      %p86 = scmp.ne.s32.totalorder %s77, %s78
      %p87 = scmp.eq.s32.totalorder %s25, 0
      %p88 = por %p86, %p87
      %p89 = scmp.ne.s32.totalorder %s77, %s78
      %p90 = scmp.eq.s32.totalorder %s26, 1
      %p91 = por %p89, %p90
      %p93 = scmp.ne.s32.totalorder %s78, %s92
      %p94 = scmp.eq.s32.totalorder %s26, 0
      %p95 = por %p93, %p94
      %s97 = sadd.s32 %s96, 1
      %p100 = scmp.eq.s32.totalorder %s20, 1
      %p101 = scmp.ne.s32.totalorder %s96, %s98
      %p102 = scmp.eq.s32.totalorder %s20, 0
      %p103 = por %p101, %p102
      %p104 = scmp.ne.s32.totalorder %s96, %s98
      %p105 = scmp.eq.s32.totalorder %s25, 1
      %p106 = por %p104, %p105
      %p107 = scmp.ne.s32.totalorder %s98, %s99
      %p108 = scmp.eq.s32.totalorder %s25, 0
      %p109 = por %p107, %p108
      %p110 = scmp.ne.s32.totalorder %s98, %s99
      %p111 = scmp.eq.s32.totalorder %s26, 1
      %p112 = por %p110, %p111
      %p114 = scmp.ne.s32.totalorder %s99, %s113
      %p115 = scmp.eq.s32.totalorder %s26, 0
      %p116 = por %p114, %p115
      %s118 = sadd.s32 %s117, 1
      %p121 = scmp.eq.s32.totalorder %s20, 1
      %p122 = scmp.ne.s32.totalorder %s117, %s119
      %p123 = scmp.eq.s32.totalorder %s20, 0
      %p124 = por %p122, %p123
      %p125 = scmp.ne.s32.totalorder %s117, %s119
      %p126 = scmp.eq.s32.totalorder %s25, 1
      %p127 = por %p125, %p126
      %p128 = scmp.ne.s32.totalorder %s119, %s120
      %p129 = scmp.eq.s32.totalorder %s25, 0
      %p130 = por %p128, %p129
      %p131 = scmp.ne.s32.totalorder %s119, %s120
      %p132 = scmp.eq.s32.totalorder %s26, 1
      %p133 = por %p131, %p132
      %p135 = scmp.ne.s32.totalorder %s120, %s134
      %p136 = scmp.eq.s32.totalorder %s26, 0
      %p137 = por %p135, %p136
      %s139 = sadd.s32 %s138, 1
      %p142 = scmp.eq.s32.totalorder %s20, 1
      %p143 = scmp.ne.s32.totalorder %s138, %s140
      %p144 = scmp.eq.s32.totalorder %s20, 0
      %p145 = por %p143, %p144
      %p146 = scmp.ne.s32.totalorder %s138, %s140
      %p147 = scmp.eq.s32.totalorder %s25, 1
      %p148 = por %p146, %p147
      %p149 = scmp.ne.s32.totalorder %s140, %s141
      %p150 = scmp.eq.s32.totalorder %s25, 0
      %p151 = por %p149, %p150
      %p152 = scmp.ne.s32.totalorder %s140, %s141
      %p153 = scmp.eq.s32.totalorder %s26, 1
      %p154 = por %p152, %p153
      %p156 = scmp.ne.s32.totalorder %s141, %s155
      %p157 = scmp.eq.s32.totalorder %s26, 0
      %p158 = por %p156, %p157
      %s160 = sadd.s32 %s159, 1
      %p163 = scmp.eq.s32.totalorder %s20, 1
      %p164 = scmp.ne.s32.totalorder %s159, %s161
      %p165 = scmp.eq.s32.totalorder %s20, 0
      %p166 = por %p164, %p165
      %p167 = scmp.ne.s32.totalorder %s159, %s161
      %p168 = scmp.eq.s32.totalorder %s25, 1
      %p169 = por %p167, %p168
      %p170 = scmp.ne.s32.totalorder %s161, %s162
      %p171 = scmp.eq.s32.totalorder %s25, 0
      %p172 = por %p170, %p171
      %p173 = scmp.ne.s32.totalorder %s161, %s162
      %p174 = scmp.eq.s32.totalorder %s26, 1
      %p175 = por %p173, %p174
      %p177 = scmp.ne.s32.totalorder %s162, %s176
      %p178 = scmp.eq.s32.totalorder %s26, 0
      %p179 = por %p177, %p178
      %s181 = sadd.s32 %s180, 1
      %p184 = scmp.eq.s32.totalorder %s20, 1
      %p185 = scmp.ne.s32.totalorder %s180, %s182
      %p186 = scmp.eq.s32.totalorder %s20, 0
      %p187 = por %p185, %p186
      %p188 = scmp.ne.s32.totalorder %s180, %s182
      %p189 = scmp.eq.s32.totalorder %s25, 1
      %p190 = por %p188, %p189
      %p191 = scmp.ne.s32.totalorder %s182, %s183
      %p192 = scmp.eq.s32.totalorder %s25, 0
      %p193 = por %p191, %p192
      %p194 = scmp.ne.s32.totalorder %s182, %s183
      %p195 = scmp.eq.s32.totalorder %s26, 1
      %p196 = por %p194, %p195
      %p198 = scmp.ne.s32.totalorder %s183, %s197
      %p199 = scmp.eq.s32.totalorder %s26, 0
      %p200 = por %p198, %p199
      %s202 = sadd.s32 %s201, 1
      %p205 = scmp.eq.s32.totalorder %s20, 1
      %p206 = scmp.ne.s32.totalorder %s201, %s203
      %p207 = scmp.eq.s32.totalorder %s20, 0
      %p208 = por %p206, %p207
      %p209 = scmp.ne.s32.totalorder %s201, %s203
      %p210 = scmp.eq.s32.totalorder %s25, 1
      %p211 = por %p209, %p210
      %p212 = scmp.ne.s32.totalorder %s203, %s204
      %p213 = scmp.eq.s32.totalorder %s25, 0
      %p214 = por %p212, %p213
      %p215 = scmp.ne.s32.totalorder %s203, %s204
      %p216 = scmp.eq.s32.totalorder %s26, 1
      %p217 = por %p215, %p216
      %p219 = scmp.ne.s32.totalorder %s204, %s218
      %p220 = scmp.eq.s32.totalorder %s26, 0
      %p221 = por %p219, %p220
      %s222 = ssub.s32 %s20, %s27
      %p223 = scmp.eq.s32.totalorder %s222, 0
      %s225 = sadd.s32 %s224, 1
      %s226 = scalar_select %p223, %s224, %s225
      %p229 = pneg %p223
      %p230 = scmp.eq.s32.totalorder %s20, 1
      %p231 = por %p229, %p230
      %p232 = scmp.ne.s32.totalorder %s224, %s227
      %p233 = scmp.eq.s32.totalorder %s20, 0
      %p234 = por %p232, %p233
      %p235 = scmp.ne.s32.totalorder %s224, %s227
      %p236 = scmp.eq.s32.totalorder %s25, 1
      %p237 = por %p235, %p236
      %p238 = scmp.ne.s32.totalorder %s227, %s228
      %p239 = scmp.eq.s32.totalorder %s25, 0
      %p240 = por %p238, %p239
      %p241 = scmp.ne.s32.totalorder %s227, %s228
      %p242 = scmp.eq.s32.totalorder %s26, 1
      %p243 = por %p241, %p242
      %p245 = scmp.ne.s32.totalorder %s228, %s244
      %p246 = scmp.eq.s32.totalorder %s26, 0
      %p247 = por %p245, %p246
      %p248 = scmp.le.s32.totalorder 1, %s20
      %p249 = scmp.lt.s32.totalorder %s20, 3
      %p250 = pnand %p248, %p249
      %p251 = pneg %p250
      // Predicated region
      $region9: #{tpu_custom_call.1} parent=5 // pred_check
        _
      $region10: #{tpu_custom_call.1} parent=5 // pred_check_branch
        %253 = sbr.rel (%p250) target = $region12
      $region11: #{tpu_custom_call.1} parent=5 // pred_region
        %s254 = ssub.s32 %s20, 1
        // Predicated region
        $region13: #{tpu_custom_call.1} parent=11 // pred_check
          %p255 = pneg %p67
        $region14: #{tpu_custom_call.1} parent=11 // pred_check_branch
          %257 = sbr.rel (%p255) target = $region16
        $region15: #{tpu_custom_call.1} parent=11 // pred_region
          _
        $region16: #{tpu_custom_call.1} parent=11 // pred_fallthru
          _
        // Predicated region
        $region17: #{tpu_custom_call.1} parent=11 // pred_check
          %p258 = pneg %p88
        $region18: #{tpu_custom_call.1} parent=11 // pred_check_branch
          %260 = sbr.rel (%p258) target = $region20
        $region19: #{tpu_custom_call.1} parent=11 // pred_region
          _
        $region20: #{tpu_custom_call.1} parent=11 // pred_fallthru
          _
        // Predicated region
        $region21: #{tpu_custom_call.1} parent=11 // pred_check
          %p261 = pneg %p109
        $region22: #{tpu_custom_call.1} parent=11 // pred_check_branch
          %263 = sbr.rel (%p261) target = $region24
        $region23: #{tpu_custom_call.1} parent=11 // pred_region
          %s265 = ssub.s32 6144, 6144
          %266 = vsyncadd [#allocation4], %s265
          %s267 = sshll.u32 [#allocation3], 4
          %s268 = int_to_ptr.vmem [resolvable:$true] %s267
          %273 = dma.hbm_to_vmem [thread:$0]  %s3, 6144, %s268, [#allocation4], 128, 128, 8
        $region24: #{tpu_custom_call.1} parent=11 // pred_fallthru
          _
        // Predicated region
        $region25: #{tpu_custom_call.1} parent=11 // pred_check
          %p274 = pneg %p130
        $region26: #{tpu_custom_call.1} parent=11 // pred_check_branch
          %276 = sbr.rel (%p274) target = $region28
        $region27: #{tpu_custom_call.1} parent=11 // pred_region
          _
        $region28: #{tpu_custom_call.1} parent=11 // pred_fallthru
          _
        // Predicated region
        $region29: #{tpu_custom_call.1} parent=11 // pred_check
          %p277 = pneg %p151
        $region30: #{tpu_custom_call.1} parent=11 // pred_check_branch
          %279 = sbr.rel (%p277) target = $region32
        $region31: #{tpu_custom_call.1} parent=11 // pred_region
          %s281 = ssub.s32 2048, 2048
          %282 = vsyncadd [#allocation7], %s281
          %s283 = sshll.u32 [#allocation6], 4
          %s284 = int_to_ptr.vmem [resolvable:$true] %s283
          %289 = dma.hbm_to_vmem [thread:$0]  %s5, 2048, %s284, [#allocation7], 128, 128, 8
        $region32: #{tpu_custom_call.1} parent=11 // pred_fallthru
          _
        // Predicated region
        $region33: #{tpu_custom_call.1} parent=11 // pred_check
          %p290 = pneg %p172
        $region34: #{tpu_custom_call.1} parent=11 // pred_check_branch
          %292 = sbr.rel (%p290) target = $region36
        $region35: #{tpu_custom_call.1} parent=11 // pred_region
          _
        $region36: #{tpu_custom_call.1} parent=11 // pred_fallthru
          _
        // Predicated region
        $region37: #{tpu_custom_call.1} parent=11 // pred_check
          %p293 = pneg %p193
        $region38: #{tpu_custom_call.1} parent=11 // pred_check_branch
          %295 = sbr.rel (%p293) target = $region40
        $region39: #{tpu_custom_call.1} parent=11 // pred_region
          _
        $region40: #{tpu_custom_call.1} parent=11 // pred_fallthru
          _
        // Predicated region
        $region41: #{tpu_custom_call.1} parent=11 // pred_check
          %p296 = pneg %p214
        $region42: #{tpu_custom_call.1} parent=11 // pred_check_branch
          %298 = sbr.rel (%p296) target = $region44
        $region43: #{tpu_custom_call.1} parent=11 // pred_region
          _
        $region44: #{tpu_custom_call.1} parent=11 // pred_fallthru
          _
      $region12: #{tpu_custom_call.1} parent=5 // pred_fallthru
        _
      %p299 = scmp.lt.s32.totalorder %s20, 2
      // Predicated region
      $region45: #{tpu_custom_call.1} parent=5 // pred_check
        %p300 = pneg %p299
      $region46: #{tpu_custom_call.1} parent=5 // pred_check_branch
        %302 = sbr.rel (%p300) target = $region48
      $region47: #{tpu_custom_call.1} parent=5 // pred_region
        // Predicated region
        $region49: #{tpu_custom_call.1} parent=47 // pred_check
          %p303 = pneg %p40
        $region50: #{tpu_custom_call.1} parent=47 // pred_check_branch
          %305 = sbr.rel (%p303) target = $region52
        $region51: #{tpu_custom_call.1} parent=47 // pred_region
          %p306 = scmp.lt.s32.totalorder %s20, 1
          %s307 = scalar_select %p306, %s20, 1
          %s308 = smul.addr %s307, 2
          %s309 = smul.addr %s308, 8
          %s310 = scalar_lea.vmem %s0, %s309
        $region52: #{tpu_custom_call.1} parent=47 // pred_fallthru
          _
      $region48: #{tpu_custom_call.1} parent=5 // pred_fallthru
        _
      %p311 = scmp.le.s32.totalorder 1, %s20
      %p312 = scmp.lt.s32.totalorder %s20, 3
      %p313 = pnand %p311, %p312
      %p314 = pneg %p313
      // Predicated region
      $region53: #{tpu_custom_call.1} parent=5 // pred_check
        _
      $region54: #{tpu_custom_call.1} parent=5 // pred_check_branch
        %316 = sbr.rel (%p313) target = $region56
      $region55: #{tpu_custom_call.1} parent=5 // pred_region
        %s317 = ssub.s32 %s20, 1
        // Predicated region
        $region57: #{tpu_custom_call.1} parent=55 // pred_check
          %p318 = pneg %p109
        $region58: #{tpu_custom_call.1} parent=55 // pred_check_branch
          %320 = sbr.rel (%p318) target = $region60
        $region59: #{tpu_custom_call.1} parent=55 // pred_region
          %321 = dma.done [#allocation4], 6144
        $region60: #{tpu_custom_call.1} parent=55 // pred_fallthru
          _
        // Predicated region
        $region61: #{tpu_custom_call.1} parent=55 // pred_check
          %p322 = pneg %p151
        $region62: #{tpu_custom_call.1} parent=55 // pred_check_branch
          %324 = sbr.rel (%p322) target = $region64
        $region63: #{tpu_custom_call.1} parent=55 // pred_region
          %325 = dma.done [#allocation7], 2048
        $region64: #{tpu_custom_call.1} parent=55 // pred_fallthru
          _
        %p326 = scmp.lt.s32.totalorder %s25, 1
        %s327 = scalar_select %p326, %s25, 1
        %s328 = smul.addr %s327, 2
        %s329 = smul.addr %s328, 8
        %s330 = scalar_lea.vmem %s0, %s329
        %p331 = pneg %p46
        %p332 = pneg %p43
        %p333 = pneg %p67
        %p334 = pneg %p64
        %p335 = pneg %p88
        %p336 = pneg %p85
        %p337 = pneg %p109
        %p338 = pneg %p106
        %p339 = pneg %p130
        %p340 = pneg %p127
        %p341 = pneg %p151
        %p342 = pneg %p148
        %p343 = pneg %p172
        %p344 = pneg %p169
        %p345 = pneg %p193
        %p346 = pneg %p190
        %p347 = pneg %p214
        %p348 = pneg %p211
        %p349 = pneg %p240
        %p350 = pneg %p237
        %s351 = sand.u32 %s227, 1
        %s352 = scalar_lea.sflag [#allocation5], %s351
        %s353 = sand.u32 %s227, 1
        %s354 = smul.addr %s353, 8
        %s355 = scalar_lea.vmem [#allocation8], %s354
        %p356 = scmp.lt.s32.totalorder %s25, 1
        %s357 = scalar_select %p356, %s25, 1
        %s358 = smul.addr %s357, 2
        %s359 = smul.addr %s358, 8
        %s360 = scalar_lea.vmem %s0, %s359
        %361 = vst [vmem:[#allocation2 + $0x7] sm:$0x1] 0.0
        %362 = vst [vmem:[#allocation2 + $0x18] sm:$0x1] 0.0
        %v363 = vld [vmem:[%s360] sm:$0xff]
        %v364 = vld [vmem:[%s360 + $0x8] sm:$0xff]
        %v365 = vld [vmem:[%s1] sm:$0xf]
        %v366 = vld [vmem:[%s2] sm:$0x1]
        %v368 = vlaneseq
        %v369 = vshrl.u32 %v368, 7
        %v370 = vsub.s32 0, %v369
        %v371 = vrot.slane %v366, %v370
        %vm373 = vcmask 31744
        %v375 = vsel %vm373, %v363, 0
        %v378 = vsel %vm373, %v364, 0
        %vm380 = vcmask 1043456
        %v382 = vsel %vm380, %v365, 0
        %384 = vmatprep.subr.mxu0 0.0
        %385 = vmatpush1.msra.mxu0 %v382
        %386 = vmatprep.subr.mxu0 0.0
        %387 = vmatpush1.msra.mxu0 0.0
        %388 = vmatprep.subr.mxu0 0.0
        %389 = vmatpush1.msra.mxu0 0.0
        %390 = vmatprep.subr.mxu0 0.0
        %391 = vmatpush1.msra.mxu0 0.0
        %392 = vmatprep.subr.mxu0 0.0
        %393 = vmatpush1.msra.mxu0 0.0
        %394 = vmatprep.subr.mxu0 0.0
        %395 = vmatpush1.msra.mxu0 0.0
        %396 = vmatprep.subr.mxu0 0.0
        %397 = vmatpush1.msra.mxu0 0.0
        %398 = vmatprep.subr.mxu0 0.0
        %399 = vmatpush1.msra.mxu0 0.0
        %400 = vmatprep.subr.mxu0 0.0
        %401 = vmatpush1.msra.mxu0 0.0
        %402 = vmatprep.subr.mxu0 0.0
        %403 = vmatpush1.msra.mxu0 0.0
        %404 = vmatprep.subr.mxu0 0.0
        %405 = vmatpush1.msra.mxu0 0.0
        %406 = vmatprep.subr.mxu0 0.0
        %407 = vmatpush1.msra.mxu0 0.0
        %408 = vmatprep.subr.mxu0 0.0
        %409 = vmatpush1.msra.mxu0 0.0
        %410 = vmatprep.subr.mxu0 0.0
        %411 = vmatpush1.msra.mxu0 0.0
        %412 = vmatprep.subr.mxu0 0.0
        %413 = vmatpush1.msra.mxu0 0.0
        %414 = vmatprep.subr.mxu0 0.0
        %415 = vmatpush1.msra.mxu0 0.0
        %416 = vmatprep.subr.mxu0 0.0
        %417 = vmatpush1.msra.mxu0 0.0
        %418 = vmatprep.subr.mxu0 0.0
        %419 = vmatpush1.msra.mxu0 0.0
        %420 = vmatprep.subr.mxu0 0.0
        %421 = vmatpush1.msra.mxu0 0.0
        %422 = vmatprep.subr.mxu0 0.0
        %423 = vmatpush1.msra.mxu0 0.0
        %424 = vmatprep.subr.mxu0 0.0
        %425 = vmatpush1.msra.mxu0 0.0
        %426 = vmatprep.subr.mxu0 0.0
        %427 = vmatpush1.msra.mxu0 0.0
        %428 = vmatprep.subr.mxu0 0.0
        %429 = vmatpush1.msra.mxu0 0.0
        %430 = vmatprep.subr.mxu0 0.0
        %431 = vmatpush1.msra.mxu0 0.0
        %432 = vmatprep.subr.mxu0 0.0
        %433 = vmatpush1.msra.mxu0 0.0
        %434 = vmatprep.subr.mxu0 0.0
        %435 = vmatpush1.msra.mxu0 0.0
        %436 = vmatprep.subr.mxu0 0.0
        %437 = vmatpush1.msra.mxu0 0.0
        %438 = vmatprep.subr.mxu0 0.0
        %439 = vmatpush1.msra.mxu0 0.0
        %440 = vmatprep.subr.mxu0 0.0
        %441 = vmatpush1.msra.mxu0 0.0
        %442 = vmatprep.subr.mxu0 0.0
        %443 = vmatpush1.msra.mxu0 0.0
        %444 = vmatprep.subr.mxu0 0.0
        %445 = vmatpush1.msra.mxu0 0.0
        %446 = vmatprep.subr.mxu0 0.0
        %447 = vmatpush1.msra.mxu0 0.0
        %448 = vmatprep.mubr.f32.mxu0 0.0
        %449 = vmatmul.mubr.f32.gmra.mrb[0].mxu0 %v375
        %v450 = vpop.f32.mrb[0].mxu0
        %v451 = vadd.f32 %v371, %v450
        %v452 = vpop.f32.mrb[0].mxu0
        %453 = vmatprep.mubr.f32.mxu0 0.0
        %454 = vmatmul.mubr.f32.gmra.mrb[0].mxu0 %v378
        %v455 = vpop.f32.mrb[0].mxu0
        %v456 = vadd.f32 %v371, %v455
        %v457 = vpop.f32.mrb[0].mxu0
        %458 = vdwg.mxu0
        %v459 = vmax.f32 %v451, 0.0
        %v460 = vmax.f32 %v456, 0.0
        %461 = vst [vmem:[#allocation2 + $0x8] sm:$0xff] %v459
        %462 = vst [vmem:[#allocation2 + $0x10] sm:$0xff] %v460
        %s463 = scalar_lea.vmem [#allocation2], 7
        %v464 = vld [vmem:[%s463] ss:$2 sm:$0xff]
        %s465 = scalar_lea.vmem [#allocation2], 8
        %v466 = vld [vmem:[%s465] ss:$2 sm:$0xff]
        %s467 = scalar_lea.vmem [#allocation2], 9
        %v468 = vld [vmem:[%s467] ss:$2 sm:$0xff]
        %v469 = vld [vmem:[#allocation3] sm:$0xff]
        %v470 = vld [vmem:[#allocation3 + $0x8] sm:$0xff]
        %v471 = vld [vmem:[#allocation3 + $0x10] sm:$0xff]
        %v472 = vld [vmem:[#allocation3 + $0x18] sm:$0xff]
        %v473 = vld [vmem:[#allocation3 + $0x20] sm:$0xff]
        %v474 = vld [vmem:[#allocation3 + $0x28] sm:$0xff]
        %v475 = vld [vmem:[#allocation3 + $0x30] sm:$0xff]
        %v476 = vld [vmem:[#allocation3 + $0x38] sm:$0xff]
        %v477 = vld [vmem:[#allocation3 + $0x40] sm:$0xff]
        %v478 = vld [vmem:[#allocation3 + $0x48] sm:$0xff]
        %v479 = vld [vmem:[#allocation3 + $0x50] sm:$0xff]
        %v480 = vld [vmem:[#allocation3 + $0x58] sm:$0xff]
        %v481 = vld [vmem:[#allocation3 + $0x60] sm:$0xff]
        %v482 = vld [vmem:[#allocation3 + $0x68] sm:$0xff]
        %v483 = vld [vmem:[#allocation3 + $0x70] sm:$0xff]
        %v484 = vld [vmem:[#allocation3 + $0x78] sm:$0xff]
        %v485 = vld [vmem:[#allocation3 + $0x80] sm:$0xff]
        %v486 = vld [vmem:[#allocation3 + $0x88] sm:$0xff]
        %v487 = vld [vmem:[#allocation3 + $0x90] sm:$0xff]
        %v488 = vld [vmem:[#allocation3 + $0x98] sm:$0xff]
        %v489 = vld [vmem:[#allocation3 + $0xa0] sm:$0xff]
        %v490 = vld [vmem:[#allocation3 + $0xa8] sm:$0xff]
        %v491 = vld [vmem:[#allocation3 + $0xb0] sm:$0xff]
        %v492 = vld [vmem:[#allocation3 + $0xb8] sm:$0xff]
        %v493 = vld [vmem:[#allocation3 + $0xc0] sm:$0xff]
        %v494 = vld [vmem:[#allocation3 + $0xc8] sm:$0xff]
        %v495 = vld [vmem:[#allocation3 + $0xd0] sm:$0xff]
        %v496 = vld [vmem:[#allocation3 + $0xd8] sm:$0xff]
        %v497 = vld [vmem:[#allocation3 + $0xe0] sm:$0xff]
        %v498 = vld [vmem:[#allocation3 + $0xe8] sm:$0xff]
        %v499 = vld [vmem:[#allocation3 + $0xf0] sm:$0xff]
        %v500 = vld [vmem:[#allocation3 + $0xf8] sm:$0xff]
        %v501 = vld [vmem:[#allocation3 + $0x100] sm:$0xff]
        %v502 = vld [vmem:[#allocation3 + $0x108] sm:$0xff]
        %v503 = vld [vmem:[#allocation3 + $0x110] sm:$0xff]
        %v504 = vld [vmem:[#allocation3 + $0x118] sm:$0xff]
        %v505 = vld [vmem:[#allocation3 + $0x120] sm:$0xff]
        %v506 = vld [vmem:[#allocation3 + $0x128] sm:$0xff]
        %v507 = vld [vmem:[#allocation3 + $0x130] sm:$0xff]
        %v508 = vld [vmem:[#allocation3 + $0x138] sm:$0xff]
        %v509 = vld [vmem:[#allocation3 + $0x140] sm:$0xff]
        %v510 = vld [vmem:[#allocation3 + $0x148] sm:$0xff]
        %v511 = vld [vmem:[#allocation3 + $0x150] sm:$0xff]
        %v512 = vld [vmem:[#allocation3 + $0x158] sm:$0xff]
        %v513 = vld [vmem:[#allocation3 + $0x160] sm:$0xff]
        %v514 = vld [vmem:[#allocation3 + $0x168] sm:$0xff]
        %v515 = vld [vmem:[#allocation3 + $0x170] sm:$0xff]
        %v516 = vld [vmem:[#allocation3 + $0x178] sm:$0xff]
        %v517 = vld [vmem:[%s4] sm:$0x1]
        %v519 = vlaneseq
        %v520 = vshrl.u32 %v519, 7
        %v521 = vsub.s32 0, %v520
        %v522 = vrot.slane %v517, %v521
        %524 = vmatprep.subr.mxu0 0.0
        %525 = vmatpush1.msra.mxu0 %v469
        %526 = vmatprep.subr.mxu0 0.0
        %527 = vmatpush1.msra.mxu0 %v470
        %528 = vmatprep.subr.mxu0 0.0
        %529 = vmatpush1.msra.mxu0 %v471
        %530 = vmatprep.subr.mxu0 0.0
        %531 = vmatpush1.msra.mxu0 %v472
        %532 = vmatprep.subr.mxu0 0.0
        %533 = vmatpush1.msra.mxu0 %v473
        %534 = vmatprep.subr.mxu0 0.0
        %535 = vmatpush1.msra.mxu0 %v474
        %536 = vmatprep.subr.mxu0 0.0
        %537 = vmatpush1.msra.mxu0 %v475
        %538 = vmatprep.subr.mxu0 0.0
        %539 = vmatpush1.msra.mxu0 %v476
        %540 = vmatprep.subr.mxu0 0.0
        %541 = vmatpush1.msra.mxu0 %v477
        %542 = vmatprep.subr.mxu0 0.0
        %543 = vmatpush1.msra.mxu0 %v478
        %544 = vmatprep.subr.mxu0 0.0
        %545 = vmatpush1.msra.mxu0 %v479
        %546 = vmatprep.subr.mxu0 0.0
        %547 = vmatpush1.msra.mxu0 %v480
        %548 = vmatprep.subr.mxu0 0.0
        %549 = vmatpush1.msra.mxu0 %v481
        %550 = vmatprep.subr.mxu0 0.0
        %551 = vmatpush1.msra.mxu0 %v482
        %552 = vmatprep.subr.mxu0 0.0
        %553 = vmatpush1.msra.mxu0 %v483
        %554 = vmatprep.subr.mxu0 0.0
        %555 = vmatpush1.msra.mxu0 %v484
        %556 = vmatprep.subr.mxu0 0.0
        %557 = vmatpush1.msra.mxu0 %v485
        %558 = vmatprep.subr.mxu0 0.0
        %559 = vmatpush1.msra.mxu0 %v486
        %560 = vmatprep.subr.mxu0 0.0
        %561 = vmatpush1.msra.mxu0 %v487
        %562 = vmatprep.subr.mxu0 0.0
        %563 = vmatpush1.msra.mxu0 %v488
        %564 = vmatprep.subr.mxu0 0.0
        %565 = vmatpush1.msra.mxu0 %v489
        %566 = vmatprep.subr.mxu0 0.0
        %567 = vmatpush1.msra.mxu0 %v490
        %568 = vmatprep.subr.mxu0 0.0
        %569 = vmatpush1.msra.mxu0 %v491
        %570 = vmatprep.subr.mxu0 0.0
        %571 = vmatpush1.msra.mxu0 %v492
        %572 = vmatprep.subr.mxu0 0.0
        %573 = vmatpush1.msra.mxu0 %v493
        %574 = vmatprep.subr.mxu0 0.0
        %575 = vmatpush1.msra.mxu0 %v494
        %576 = vmatprep.subr.mxu0 0.0
        %577 = vmatpush1.msra.mxu0 %v495
        %578 = vmatprep.subr.mxu0 0.0
        %579 = vmatpush1.msra.mxu0 %v496
        %580 = vmatprep.subr.mxu0 0.0
        %581 = vmatpush1.msra.mxu0 %v497
        %582 = vmatprep.subr.mxu0 0.0
        %583 = vmatpush1.msra.mxu0 %v498
        %584 = vmatprep.subr.mxu0 0.0
        %585 = vmatpush1.msra.mxu0 %v499
        %586 = vmatprep.subr.mxu0 0.0
        %587 = vmatpush1.msra.mxu0 %v500
        %588 = vmatprep.mubr.f32.mxu0 %v466
        %589 = vmatmul.mubr.f32.gmra.mrb[0].mxu0 %v464
        %v590 = vpop.f32.mrb[0].mxu0
        %v591 = vadd.f32 %v522, %v590
        %v592 = vpop.f32.mrb[0].mxu0
        %593 = vdwg.mxu0
        %594 = vmatprep.subr.mxu0 0.0
        %595 = vmatpush1.msra.mxu0 %v501
        %596 = vmatprep.subr.mxu0 0.0
        %597 = vmatpush1.msra.mxu0 %v502
        %598 = vmatprep.subr.mxu0 0.0
        %599 = vmatpush1.msra.mxu0 %v503
        %600 = vmatprep.subr.mxu0 0.0
        %601 = vmatpush1.msra.mxu0 %v504
        %602 = vmatprep.subr.mxu0 0.0
        %603 = vmatpush1.msra.mxu0 %v505
        %604 = vmatprep.subr.mxu0 0.0
        %605 = vmatpush1.msra.mxu0 %v506
        %606 = vmatprep.subr.mxu0 0.0
        %607 = vmatpush1.msra.mxu0 %v507
        %608 = vmatprep.subr.mxu0 0.0
        %609 = vmatpush1.msra.mxu0 %v508
        %610 = vmatprep.subr.mxu0 0.0
        %611 = vmatpush1.msra.mxu0 %v509
        %612 = vmatprep.subr.mxu0 0.0
        %613 = vmatpush1.msra.mxu0 %v510
        %614 = vmatprep.subr.mxu0 0.0
        %615 = vmatpush1.msra.mxu0 %v511
        %616 = vmatprep.subr.mxu0 0.0
        %617 = vmatpush1.msra.mxu0 %v512
        %618 = vmatprep.subr.mxu0 0.0
        %619 = vmatpush1.msra.mxu0 %v513
        %620 = vmatprep.subr.mxu0 0.0
        %621 = vmatpush1.msra.mxu0 %v514
        %622 = vmatprep.subr.mxu0 0.0
        %623 = vmatpush1.msra.mxu0 %v515
        %624 = vmatprep.subr.mxu0 0.0
        %625 = vmatpush1.msra.mxu0 %v516
        %626 = vmatprep.subr.mxu0 0.0
        %627 = vmatpush1.msra.mxu0 0.0
        %628 = vmatprep.subr.mxu0 0.0
        %629 = vmatpush1.msra.mxu0 0.0
        %630 = vmatprep.subr.mxu0 0.0
        %631 = vmatpush1.msra.mxu0 0.0
        %632 = vmatprep.subr.mxu0 0.0
        %633 = vmatpush1.msra.mxu0 0.0
        %634 = vmatprep.subr.mxu0 0.0
        %635 = vmatpush1.msra.mxu0 0.0
        %636 = vmatprep.subr.mxu0 0.0
        %637 = vmatpush1.msra.mxu0 0.0
        %638 = vmatprep.subr.mxu0 0.0
        %639 = vmatpush1.msra.mxu0 0.0
        %640 = vmatprep.subr.mxu0 0.0
        %641 = vmatpush1.msra.mxu0 0.0
        %642 = vmatprep.subr.mxu0 0.0
        %643 = vmatpush1.msra.mxu0 0.0
        %644 = vmatprep.subr.mxu0 0.0
        %645 = vmatpush1.msra.mxu0 0.0
        %646 = vmatprep.subr.mxu0 0.0
        %647 = vmatpush1.msra.mxu0 0.0
        %648 = vmatprep.subr.mxu0 0.0
        %649 = vmatpush1.msra.mxu0 0.0
        %650 = vmatprep.subr.mxu0 0.0
        %651 = vmatpush1.msra.mxu0 0.0
        %652 = vmatprep.subr.mxu0 0.0
        %653 = vmatpush1.msra.mxu0 0.0
        %654 = vmatprep.subr.mxu0 0.0
        %655 = vmatpush1.msra.mxu0 0.0
        %656 = vmatprep.subr.mxu0 0.0
        %657 = vmatpush1.msra.mxu0 0.0
        %658 = vmatprep.mubr.f32.mxu0 0.0
        %659 = vmatmul.mubr.f32.gmra.mrb[0].mxu0 %v468
        %v660 = vpop.f32.mrb[0].mxu0
        %v661 = vadd.f32 %v591, %v660
        %v662 = vpop.f32.mrb[0].mxu0
        %663 = vdwg.mxu0
        %v664 = vmax.f32 %v661, 0.0
        %v665 = vld [vmem:[#allocation6] sm:$0xff]
        %v666 = vld [vmem:[#allocation6 + $0x8] sm:$0xff]
        %v667 = vld [vmem:[#allocation6 + $0x10] sm:$0xff]
        %v668 = vld [vmem:[#allocation6 + $0x18] sm:$0xff]
        %v669 = vld [vmem:[#allocation6 + $0x20] sm:$0xff]
        %v670 = vld [vmem:[#allocation6 + $0x28] sm:$0xff]
        %v671 = vld [vmem:[#allocation6 + $0x30] sm:$0xff]
        %v672 = vld [vmem:[#allocation6 + $0x38] sm:$0xff]
        %v673 = vld [vmem:[#allocation6 + $0x40] sm:$0xff]
        %v674 = vld [vmem:[#allocation6 + $0x48] sm:$0xff]
        %v675 = vld [vmem:[#allocation6 + $0x50] sm:$0xff]
        %v676 = vld [vmem:[#allocation6 + $0x58] sm:$0xff]
        %v677 = vld [vmem:[#allocation6 + $0x60] sm:$0xff]
        %v678 = vld [vmem:[#allocation6 + $0x68] sm:$0xff]
        %v679 = vld [vmem:[#allocation6 + $0x70] sm:$0xff]
        %v680 = vld [vmem:[#allocation6 + $0x78] sm:$0xff]
        %v681 = vld [vmem:[%s6] sm:$0x1]
        %v683 = vlaneseq
        %v684 = vshrl.u32 %v683, 7
        %v685 = vsub.s32 0, %v684
        %v686 = vrot.slane %v681, %v685
        %688 = vmatprep.subr.mxu0 0.0
        %689 = vmatpush1.msra.mxu0 %v665
        %690 = vmatprep.subr.mxu0 0.0
        %691 = vmatpush1.msra.mxu0 %v666
        %692 = vmatprep.subr.mxu0 0.0
        %693 = vmatpush1.msra.mxu0 %v667
        %694 = vmatprep.subr.mxu0 0.0
        %695 = vmatpush1.msra.mxu0 %v668
        %696 = vmatprep.subr.mxu0 0.0
        %697 = vmatpush1.msra.mxu0 %v669
        %698 = vmatprep.subr.mxu0 0.0
        %699 = vmatpush1.msra.mxu0 %v670
        %700 = vmatprep.subr.mxu0 0.0
        %701 = vmatpush1.msra.mxu0 %v671
        %702 = vmatprep.subr.mxu0 0.0
        %703 = vmatpush1.msra.mxu0 %v672
        %704 = vmatprep.subr.mxu0 0.0
        %705 = vmatpush1.msra.mxu0 %v673
        %706 = vmatprep.subr.mxu0 0.0
        %707 = vmatpush1.msra.mxu0 %v674
        %708 = vmatprep.subr.mxu0 0.0
        %709 = vmatpush1.msra.mxu0 %v675
        %710 = vmatprep.subr.mxu0 0.0
        %711 = vmatpush1.msra.mxu0 %v676
        %712 = vmatprep.subr.mxu0 0.0
        %713 = vmatpush1.msra.mxu0 %v677
        %714 = vmatprep.subr.mxu0 0.0
        %715 = vmatpush1.msra.mxu0 %v678
        %716 = vmatprep.subr.mxu0 0.0
        %717 = vmatpush1.msra.mxu0 %v679
        %718 = vmatprep.subr.mxu0 0.0
        %719 = vmatpush1.msra.mxu0 %v680
        %720 = vmatprep.subr.mxu0 0.0
        %721 = vmatpush1.msra.mxu0 0.0
        %722 = vmatprep.subr.mxu0 0.0
        %723 = vmatpush1.msra.mxu0 0.0
        %724 = vmatprep.subr.mxu0 0.0
        %725 = vmatpush1.msra.mxu0 0.0
        %726 = vmatprep.subr.mxu0 0.0
        %727 = vmatpush1.msra.mxu0 0.0
        %728 = vmatprep.subr.mxu0 0.0
        %729 = vmatpush1.msra.mxu0 0.0
        %730 = vmatprep.subr.mxu0 0.0
        %731 = vmatpush1.msra.mxu0 0.0
        %732 = vmatprep.subr.mxu0 0.0
        %733 = vmatpush1.msra.mxu0 0.0
        %734 = vmatprep.subr.mxu0 0.0
        %735 = vmatpush1.msra.mxu0 0.0
        %736 = vmatprep.subr.mxu0 0.0
        %737 = vmatpush1.msra.mxu0 0.0
        %738 = vmatprep.subr.mxu0 0.0
        %739 = vmatpush1.msra.mxu0 0.0
        %740 = vmatprep.subr.mxu0 0.0
        %741 = vmatpush1.msra.mxu0 0.0
        %742 = vmatprep.subr.mxu0 0.0
        %743 = vmatpush1.msra.mxu0 0.0
        %744 = vmatprep.subr.mxu0 0.0
        %745 = vmatpush1.msra.mxu0 0.0
        %746 = vmatprep.subr.mxu0 0.0
        %747 = vmatpush1.msra.mxu0 0.0
        %748 = vmatprep.subr.mxu0 0.0
        %749 = vmatpush1.msra.mxu0 0.0
        %750 = vmatprep.subr.mxu0 0.0
        %751 = vmatpush1.msra.mxu0 0.0
        %752 = vmatprep.mubr.f32.mxu0 0.0
        %753 = vmatmul.mubr.f32.gmra.mrb[0].mxu0 %v664
        %v754 = vpop.f32.mrb[0].mxu0
        %v755 = vadd.f32 %v686, %v754
        %v756 = vpop.f32.mrb[0].mxu0
        %757 = vdwg.mxu0
        %v758 = vld [vmem:[%s360] ss:$2 sm:$0xff]
        %v759 = vld [vmem:[%s7] sm:$0xf]
        %v760 = vld [vmem:[%s8] sm:$0x1]
        %v762 = vlaneseq
        %v763 = vshrl.u32 %v762, 7
        %v764 = vsub.s32 0, %v763
        %v765 = vrot.slane %v760, %v764
        %v768 = vsel %vm373, %v758, 0
        %v771 = vsel %vm380, %v759, 0
        %773 = vmatprep.subr.mxu0 0.0
        %774 = vmatpush1.msra.mxu0 %v771
        %775 = vmatprep.subr.mxu0 0.0
        %776 = vmatpush1.msra.mxu0 0.0
        %777 = vmatprep.subr.mxu0 0.0
        %778 = vmatpush1.msra.mxu0 0.0
        %779 = vmatprep.subr.mxu0 0.0
        %780 = vmatpush1.msra.mxu0 0.0
        %781 = vmatprep.subr.mxu0 0.0
        %782 = vmatpush1.msra.mxu0 0.0
        %783 = vmatprep.subr.mxu0 0.0
        %784 = vmatpush1.msra.mxu0 0.0
        %785 = vmatprep.subr.mxu0 0.0
        %786 = vmatpush1.msra.mxu0 0.0
        %787 = vmatprep.subr.mxu0 0.0
        %788 = vmatpush1.msra.mxu0 0.0
        %789 = vmatprep.subr.mxu0 0.0
        %790 = vmatpush1.msra.mxu0 0.0
        %791 = vmatprep.subr.mxu0 0.0
        %792 = vmatpush1.msra.mxu0 0.0
        %793 = vmatprep.subr.mxu0 0.0
        %794 = vmatpush1.msra.mxu0 0.0
        %795 = vmatprep.subr.mxu0 0.0
        %796 = vmatpush1.msra.mxu0 0.0
        %797 = vmatprep.subr.mxu0 0.0
        %798 = vmatpush1.msra.mxu0 0.0
        %799 = vmatprep.subr.mxu0 0.0
        %800 = vmatpush1.msra.mxu0 0.0
        %801 = vmatprep.subr.mxu0 0.0
        %802 = vmatpush1.msra.mxu0 0.0
        %803 = vmatprep.subr.mxu0 0.0
        %804 = vmatpush1.msra.mxu0 0.0
        %805 = vmatprep.subr.mxu0 0.0
        %806 = vmatpush1.msra.mxu0 0.0
        %807 = vmatprep.subr.mxu0 0.0
        %808 = vmatpush1.msra.mxu0 0.0
        %809 = vmatprep.subr.mxu0 0.0
        %810 = vmatpush1.msra.mxu0 0.0
        %811 = vmatprep.subr.mxu0 0.0
        %812 = vmatpush1.msra.mxu0 0.0
        %813 = vmatprep.subr.mxu0 0.0
        %814 = vmatpush1.msra.mxu0 0.0
        %815 = vmatprep.subr.mxu0 0.0
        %816 = vmatpush1.msra.mxu0 0.0
        %817 = vmatprep.subr.mxu0 0.0
        %818 = vmatpush1.msra.mxu0 0.0
        %819 = vmatprep.subr.mxu0 0.0
        %820 = vmatpush1.msra.mxu0 0.0
        %821 = vmatprep.subr.mxu0 0.0
        %822 = vmatpush1.msra.mxu0 0.0
        %823 = vmatprep.subr.mxu0 0.0
        %824 = vmatpush1.msra.mxu0 0.0
        %825 = vmatprep.subr.mxu0 0.0
        %826 = vmatpush1.msra.mxu0 0.0
        %827 = vmatprep.subr.mxu0 0.0
        %828 = vmatpush1.msra.mxu0 0.0
        %829 = vmatprep.subr.mxu0 0.0
        %830 = vmatpush1.msra.mxu0 0.0
        %831 = vmatprep.subr.mxu0 0.0
        %832 = vmatpush1.msra.mxu0 0.0
        %833 = vmatprep.subr.mxu0 0.0
        %834 = vmatpush1.msra.mxu0 0.0
        %835 = vmatprep.subr.mxu0 0.0
        %836 = vmatpush1.msra.mxu0 0.0
        %837 = vmatprep.mubr.f32.mxu0 0.0
        %838 = vmatmul.mubr.f32.gmra.mrb[0].mxu0 %v768
        %v839 = vpop.f32.mrb[0].mxu0
        %v840 = vadd.f32 %v765, %v839
        %v841 = vpop.f32.mrb[0].mxu0
        %842 = vdwg.mxu0
        %v843 = vadd.f32 %v755, %v840
        %v844 = vmax.f32 %v843, 0.0
        %845 = vst [vmem:[%s355] sm:$0xff] %v844
        %s846 = sand.u32 %s227, 1
        %s847 = scalar_lea.sflag [#allocation5], %s846
        %s848 = sand.u32 %s227, 1
        %s849 = smul.addr %s848, 8
        %s850 = scalar_lea.vmem [#allocation8], %s849
        // Predicated region
        $region65: #{tpu_custom_call.1} parent=55 // pred_check
          %p851 = pneg %p237
        $region66: #{tpu_custom_call.1} parent=55 // pred_check_branch
          %853 = sbr.rel (%p851) target = $region68
        $region67: #{tpu_custom_call.1} parent=55 // pred_region
          %s855 = ssub.s32 128, 128
          %856 = vsyncadd %s847, %s855
          %s857 = smul.addr %s25, 128
          %s858 = scalar_lea.hbm %s9, %s857
          %s860 = sshll.u32 %s850, 4
          %s861 = int_to_ptr.vmem [resolvable:$true] %s860
          %863 = dma.vmem_to_hbm [thread:$0]  %s861, 128, %s858, %s847
        $region68: #{tpu_custom_call.1} parent=55 // pred_fallthru
          _
      $region56: #{tpu_custom_call.1} parent=5 // pred_fallthru
        _
      %p864 = scmp.le.s32.totalorder 2, %s20
      // Predicated region
      $region69: #{tpu_custom_call.1} parent=5 // pred_check
        %p865 = pneg %p864
      $region70: #{tpu_custom_call.1} parent=5 // pred_check_branch
        %867 = sbr.rel (%p865) target = $region72
      $region71: #{tpu_custom_call.1} parent=5 // pred_region
        %s868 = ssub.s32 %s20, 2
        // Predicated region
        $region73: #{tpu_custom_call.1} parent=71 // pred_check
          %p869 = pneg %p243
        $region74: #{tpu_custom_call.1} parent=71 // pred_check_branch
          %871 = sbr.rel (%p869) target = $region76
        $region75: #{tpu_custom_call.1} parent=71 // pred_region
          %s872 = sand.u32 %s228, 1
          %s873 = scalar_lea.sflag [#allocation5], %s872
          %s874 = sand.u32 %s228, 1
          %s875 = smul.addr %s874, 8
          %s876 = scalar_lea.vmem [#allocation8], %s875
          %877 = dma.done %s873, 128
        $region76: #{tpu_custom_call.1} parent=71 // pred_fallthru
          _
      $region72: #{tpu_custom_call.1} parent=5 // pred_fallthru
        _
    $region6: #{tpu_custom_call.1} parent=1 // loop_footer
      %s24 = sadd.s32 1, %s20
    $region7: #{tpu_custom_call.1} parent=1 // loop_footer_branch
      %19 = sbr.rel target = $region3
    $region8: #{tpu_custom_call.1} parent=1 // loop_exit
      _
    %878 = vsyncpa [#allocation4], 1
    %s879 = scalar_lea.sflag [#allocation4], 1
    %880 = vsyncpa %s879, 1
    %881 = vsyncpa [#allocation7], 1
    %882 = vsyncpa [#allocation5], 1
    %s883 = scalar_lea.sflag [#allocation5], 1
    %884 = vsyncpa %s883, 1

</llo_original>
